<compile_context>
chip_gen: v7x
topology: tpu7x:2x2x1
jax: 0.10.0
libtpu: 0.0.40
codegen_flags: <defaults>
</compile_context>

<pallas_src>
import jax
import jax.numpy as jnp
from jax.experimental import pallas as pl
from jax.experimental.pallas import tpu as pltpu


def classifier_kernel(x_ref, w1_ref, b1_ref, w2_ref, b2_ref,
                      h_ref, out_ref, sm_ref):
    # x/w1/w2 arrive as bf16; matmuls accumulate in f32 on the MXU.
    h = jnp.tanh(
        jnp.dot(x_ref[...], w1_ref[...], preferred_element_type=jnp.float32)
        + b1_ref[...])                                        # (TB, H) f32

    logits = (jnp.dot(h.astype(jnp.bfloat16), w2_ref[...],
                      preferred_element_type=jnp.float32)
              + b2_ref[...])                                  # (TB, C) f32

    # numerically stable softmax along the last dim (all f32)
    m = jnp.max(logits, axis=-1, keepdims=True)
    e = jnp.exp(logits - m)
    denom = jnp.sum(e, axis=-1, keepdims=True)
    probs = e * pl.reciprocal(denom, approx=True)             # EUP vrcp

    h_ref[...] = h.astype(h_ref.dtype)
    out_ref[...] = logits.astype(out_ref.dtype)
    sm_ref[...] = probs.astype(sm_ref.dtype)


def classifier_forward(x, w1, b1, w2, b2, *, tb=128):
    """Fused predictor + softmax head.  Returns (h, logits, softmax(logits))."""
    B, F = x.shape
    H = w1.shape[1]
    C = w2.shape[1]

    TB = min(tb, B)
    # Pad the batch up to a multiple of TB so the grid divides evenly.
    Bp = ((B + TB - 1) // TB) * TB
    x_p = jnp.pad(x, ((0, Bp - B), (0, 0))) if Bp != B else x

    # bf16 feeds the MXU and halves HBM/VMEM traffic for x and the weights.
    x_bf = x_p.astype(jnp.bfloat16)
    w1_bf = w1.astype(jnp.bfloat16)
    w2_bf = w2.astype(jnp.bfloat16)
    b1_f = b1.astype(jnp.float32).reshape(1, H)
    b2_f = b2.astype(jnp.float32).reshape(1, C)

    grid = (Bp // TB,)

    h, logits, sm = pl.pallas_call(
        classifier_kernel,
        grid=grid,
        in_specs=[
            pl.BlockSpec((TB, F), lambda i: (i, 0)),   # x tile (pipelined)
            pl.BlockSpec((F, H), lambda i: (0, 0)),    # W1 resident
            pl.BlockSpec((1, H), lambda i: (0, 0)),    # b1 resident
            pl.BlockSpec((H, C), lambda i: (0, 0)),    # W2 resident
            pl.BlockSpec((1, C), lambda i: (0, 0)),    # b2 resident
        ],
        out_specs=(
            pl.BlockSpec((TB, H), lambda i: (i, 0)),
            pl.BlockSpec((TB, C), lambda i: (i, 0)),
            pl.BlockSpec((TB, C), lambda i: (i, 0)),
        ),
        out_shape=(
            jax.ShapeDtypeStruct((Bp, H), jnp.float32),   # h
            jax.ShapeDtypeStruct((Bp, C), jnp.float32),   # output (logits)
            jax.ShapeDtypeStruct((Bp, C), jnp.float32),   # softmax(output)
        ),
        compiler_params=pltpu.CompilerParams(
            dimension_semantics=("parallel",)),
    )(x_bf, w1_bf, b1_f, w2_bf, b2_f)

    if Bp != B:
        h, logits, sm = h[:B], logits[:B], sm[:B]
    return h, logits, sm


if __name__ == "__main__":
    # Lane-dense, MXU-friendly shapes (multiples of 128); batch gives a
    # 2-step grid so the pipeline actually overlaps DMA with compute.
    B, F, H, C = 256, 128, 128, 128

    key = jax.random.PRNGKey(0)
    kx, k1, k2, k3, k4 = jax.random.split(key, 5)
    x = jax.random.normal(kx, (B, F), dtype=jnp.float32)
    w1 = jax.random.normal(k1, (F, H), dtype=jnp.float32) * 0.1
    b1 = jax.random.normal(k2, (1, H), dtype=jnp.float32) * 0.1
    w2 = jax.random.normal(k3, (H, C), dtype=jnp.float32) * 0.1
    b2 = jax.random.normal(k4, (1, C), dtype=jnp.float32) * 0.1

    h, out, sm = classifier_forward(x, w1, b1, w2, b2)
    jax.block_until_ready((h, out, sm))

    # Reference in plain JAX, using the same bf16-matmul / f32-accumulate path
    # so tolerances stay tight.
    x_bf, w1_bf, w2_bf = (a.astype(jnp.bfloat16) for a in (x, w1, w2))
    h_ref = jnp.tanh(
        jnp.dot(x_bf, w1_bf, preferred_element_type=jnp.float32) + b1)
    out_ref = (jnp.dot(h_ref.astype(jnp.bfloat16), w2_bf,
                       preferred_element_type=jnp.float32) + b2)
    sm_ref = jax.nn.softmax(out_ref, axis=-1)

    assert jnp.allclose(h, h_ref, atol=2e-2), "hidden mismatch"
    assert jnp.allclose(out, out_ref, atol=2e-2), "logits mismatch"
    # approx reciprocal -> ~1e-3 relative error on softmax rows
    assert jnp.allclose(sm, sm_ref, atol=5e-3), "softmax mismatch"
    assert jnp.allclose(jnp.sum(sm, axis=-1), 1.0, atol=5e-3)

    print("KERNEL_OK")
</pallas_src>

<mosaic_0001>
module attributes {stable_mosaic.version = 11 : i64} {
  func.func @classifier_kernel(%arg0: i32, %arg1: memref<128x128xbf16, #tpu.memory_space<vmem>>, %arg2: memref<128x128xbf16, #tpu.memory_space<vmem>>, %arg3: memref<1x128xf32, #tpu.memory_space<vmem>>, %arg4: memref<128x128xbf16, #tpu.memory_space<vmem>>, %arg5: memref<1x128xf32, #tpu.memory_space<vmem>>, %arg6: memref<128x128xf32, #tpu.memory_space<vmem>>, %arg7: memref<128x128xf32, #tpu.memory_space<vmem>>, %arg8: memref<128x128xf32, #tpu.memory_space<vmem>>) attributes {dimension_semantics = [#tpu.dimension_semantics<parallel>], iteration_bounds = array<i64: 2>, scalar_prefetch = 0 : i64, scratch_operands = 0 : i64, tpu.core_type = #tpu.core_type<tc>, window_params = [{transform_indices = @transform_0, window_bounds = array<i64: 128, 128>}, {pipeline_mode = #tpu.pipeline_mode<synchronous>, transform_indices = @transform_1, window_bounds = array<i64: 128, 128>}, {pipeline_mode = #tpu.pipeline_mode<synchronous>, transform_indices = @transform_2, window_bounds = array<i64: 1, 128>}, {pipeline_mode = #tpu.pipeline_mode<synchronous>, transform_indices = @transform_3, window_bounds = array<i64: 128, 128>}, {pipeline_mode = #tpu.pipeline_mode<synchronous>, transform_indices = @transform_4, window_bounds = array<i64: 1, 128>}, {transform_indices = @transform_5, window_bounds = array<i64: 128, 128>}, {transform_indices = @transform_6, window_bounds = array<i64: 128, 128>}, {transform_indices = @transform_7, window_bounds = array<i64: 128, 128>}]} {
    %c0 = arith.constant 0 : index
    %c0_0 = arith.constant 0 : index
    %0 = vector.load %arg1[%c0, %c0_0] : memref<128x128xbf16, #tpu.memory_space<vmem>>, vector<128x128xbf16>
    %c0_1 = arith.constant 0 : index
    %c0_2 = arith.constant 0 : index
    %1 = vector.load %arg2[%c0_1, %c0_2] : memref<128x128xbf16, #tpu.memory_space<vmem>>, vector<128x128xbf16>
    %cst = arith.constant dense<0.000000e+00> : vector<128x128xf32>
    %2 = tpu.matmul %0, %1, %cst {dimension_numbers = #tpu.dot_dimension_numbers<[1], [0], [0], [1], [0, 0, 1, 1], [], []>} : vector<128x128xbf16>, vector<128x128xbf16>, vector<128x128xf32> -> vector<128x128xf32>
    %c0_3 = arith.constant 0 : index
    %c0_4 = arith.constant 0 : index
    %3 = vector.load %arg3[%c0_3, %c0_4] : memref<1x128xf32, #tpu.memory_space<vmem>>, vector<1x128xf32>
    %4 = vector.broadcast %3 : vector<1x128xf32> to vector<128x128xf32>
    %5 = arith.addf %2, %4 : vector<128x128xf32>
    %6 = math.tanh %5 : vector<128x128xf32>
    %7 = arith.truncf %6 : vector<128x128xf32> to vector<128x128xbf16>
    %c0_5 = arith.constant 0 : index
    %c0_6 = arith.constant 0 : index
    %8 = vector.load %arg4[%c0_5, %c0_6] : memref<128x128xbf16, #tpu.memory_space<vmem>>, vector<128x128xbf16>
    %cst_7 = arith.constant dense<0.000000e+00> : vector<128x128xf32>
    %9 = tpu.matmul %7, %8, %cst_7 {dimension_numbers = #tpu.dot_dimension_numbers<[1], [0], [0], [1], [0, 0, 1, 1], [], []>} : vector<128x128xbf16>, vector<128x128xbf16>, vector<128x128xf32> -> vector<128x128xf32>
    %c0_8 = arith.constant 0 : index
    %c0_9 = arith.constant 0 : index
    %10 = vector.load %arg5[%c0_8, %c0_9] : memref<1x128xf32, #tpu.memory_space<vmem>>, vector<1x128xf32>
    %11 = vector.broadcast %10 : vector<1x128xf32> to vector<128x128xf32>
    %12 = arith.addf %9, %11 : vector<128x128xf32>
    %cst_10 = arith.constant dense<0xFF800000> : vector<128xf32>
    %13 = vector.multi_reduction <maximumf>, %12, %cst_10 [1] : vector<128x128xf32> to vector<128xf32>
    %14 = vector.shape_cast %13 : vector<128xf32> to vector<128x1xf32>
    %15 = vector.broadcast %14 : vector<128x1xf32> to vector<128x128xf32>
    %16 = arith.subf %12, %15 : vector<128x128xf32>
    %17 = math.exp %16 : vector<128x128xf32>
    %cst_11 = arith.constant dense<0.000000e+00> : vector<128xf32>
    %18 = vector.multi_reduction <add>, %17, %cst_11 [1] : vector<128x128xf32> to vector<128xf32>
    %19 = vector.shape_cast %18 : vector<128xf32> to vector<128x1xf32>
    %20 = tpu.reciprocal %19 {approx = true} : vector<128x1xf32> -> vector<128x1xf32>
    %21 = vector.broadcast %20 : vector<128x1xf32> to vector<128x128xf32>
    %22 = arith.mulf %17, %21 : vector<128x128xf32>
    %c0_12 = arith.constant 0 : index
    %c0_13 = arith.constant 0 : index
    %23 = vector.load %arg6[%c0_12, %c0_13] : memref<128x128xf32, #tpu.memory_space<vmem>>, vector<128x128xf32>
    tpu.vector_store %arg6[%c0_12, %c0_13], %6 {strides = array<i32>} : memref<128x128xf32, #tpu.memory_space<vmem>>, vector<128x128xf32>,
    %c0_14 = arith.constant 0 : index
    %c0_15 = arith.constant 0 : index
    %24 = vector.load %arg7[%c0_14, %c0_15] : memref<128x128xf32, #tpu.memory_space<vmem>>, vector<128x128xf32>
    tpu.vector_store %arg7[%c0_14, %c0_15], %12 {strides = array<i32>} : memref<128x128xf32, #tpu.memory_space<vmem>>, vector<128x128xf32>,
    %c0_16 = arith.constant 0 : index
    %c0_17 = arith.constant 0 : index
    %25 = vector.load %arg8[%c0_16, %c0_17] : memref<128x128xf32, #tpu.memory_space<vmem>>, vector<128x128xf32>
    tpu.vector_store %arg8[%c0_16, %c0_17], %22 {strides = array<i32>} : memref<128x128xf32, #tpu.memory_space<vmem>>, vector<128x128xf32>,
    return
  }
  func.func @transform_0(%arg0: i32) -> (i32, i32) {
    %c0_i32 = arith.constant 0 : i32
    %c0_i32_0 = arith.constant 0 : i32
    return %arg0, %c0_i32 : i32, i32
  }
  func.func @transform_1(%arg0: i32) -> (i32, i32) {
    %c0_i32 = arith.constant 0 : i32
    %c0_i32_0 = arith.constant 0 : i32
    %c0_i32_1 = arith.constant 0 : i32
    return %c0_i32, %c0_i32_0 : i32, i32
  }
  func.func @transform_2(%arg0: i32) -> (i32, i32) {
    %c0_i32 = arith.constant 0 : i32
    %c0_i32_0 = arith.constant 0 : i32
    %c0_i32_1 = arith.constant 0 : i32
    return %c0_i32, %c0_i32_0 : i32, i32
  }
  func.func @transform_3(%arg0: i32) -> (i32, i32) {
    %c0_i32 = arith.constant 0 : i32
    %c0_i32_0 = arith.constant 0 : i32
    %c0_i32_1 = arith.constant 0 : i32
    return %c0_i32, %c0_i32_0 : i32, i32
  }
  func.func @transform_4(%arg0: i32) -> (i32, i32) {
    %c0_i32 = arith.constant 0 : i32
    %c0_i32_0 = arith.constant 0 : i32
    %c0_i32_1 = arith.constant 0 : i32
    return %c0_i32, %c0_i32_0 : i32, i32
  }
  func.func @transform_5(%arg0: i32) -> (i32, i32) {
    %c0_i32 = arith.constant 0 : i32
    %c0_i32_0 = arith.constant 0 : i32
    return %arg0, %c0_i32 : i32, i32
  }
  func.func @transform_6(%arg0: i32) -> (i32, i32) {
    %c0_i32 = arith.constant 0 : i32
    %c0_i32_0 = arith.constant 0 : i32
    return %arg0, %c0_i32 : i32, i32
  }
  func.func @transform_7(%arg0: i32) -> (i32, i32) {
    %c0_i32 = arith.constant 0 : i32
    %c0_i32_0 = arith.constant 0 : i32
    return %arg0, %c0_i32 : i32, i32
  }
}

</mosaic_0001>

<llo_original>
// kernel: tpu_custom_call.1
$region0: #{tpu_custom_call.1}
  #allocation0 [shape = 'u32[]', space=smem, size = 0x4, offset = 0x4, fixed_abs, tag = 'smem constant byte address 0x4 - core index']
  #allocation1 [shape = 'u32[144,128]{1,0:T(1,128)}', space=vmem, size = 0x12000, scoped, tag = 'internal scratch']
  %s0 = inlined_call_operand.hbm [shape: bf16[256,128], index: 0, kind: input, shape index: {}]
  %s1 = inlined_call_operand.hbm [shape: bf16[128,128], index: 1, kind: input, shape index: {}]
  %s2 = inlined_call_operand.vmem [shape: f32[1,128], index: 2, kind: input, shape index: {}]
  %s3 = inlined_call_operand.hbm [shape: bf16[128,128], index: 3, kind: input, shape index: {}]
  %s4 = inlined_call_operand.vmem [shape: f32[1,128], index: 4, kind: input, shape index: {}]
  %s5 = inlined_call_operand.hbm [shape: f32[256,128], index: 5, kind: output, shape index: {0}]
  %s6 = inlined_call_operand.hbm [shape: f32[256,128], index: 6, kind: output, shape index: {1}]
  %s7 = inlined_call_operand.hbm [shape: f32[256,128], index: 7, kind: output, shape index: {2}]
  %8 = xla_tuple %s5, %s6, %s7
  %s9 = sld [smem:[#allocation0]]
  $region81: #{tpu_custom_call.1} parent=0
    _
  %s11 = ssub.s32 1, %s9
  %s12 = scalar_select 0, %s11, %s9
  $region1: #{tpu_custom_call.1} parent=0
    #allocation2 [shape = 'u8[65536]{0}', space=vmem, size = 0x10000, scoped, tag = 'input window, operand 0']
    #allocation3 [shape = 's32[2]{0}', space=sflag, size = 0x8, scoped, tag = 'scoped memory for tpu_custom_call.1']
    #allocation4 [shape = 's32[2]{0}', space=sflag, size = 0x8, scoped, tag = 'scoped memory for tpu_custom_call.1']
    #allocation5 [shape = 'u8[32768]{0}', space=vmem, size = 0x8000, scoped, tag = 'input window, operand 1, single buffered']
    #allocation6 [shape = 's32[1]{0}', space=sflag, size = 0x4, scoped, tag = 'scoped memory for tpu_custom_call.1']
    #allocation7 [shape = 'u8[32768]{0}', space=vmem, size = 0x8000, scoped, tag = 'input window, operand 3, single buffered']
    #allocation8 [shape = 'u8[131072]{0}', space=vmem, size = 0x20000, scoped, tag = 'output window, operand 0']
    #allocation9 [shape = 'u8[131072]{0}', space=vmem, size = 0x20000, scoped, tag = 'output window, operand 1']
    #allocation10 [shape = 's32[2]{0}', space=sflag, size = 0x8, scoped, tag = 'scoped memory for tpu_custom_call.1']
    #allocation11 [shape = 'u8[131072]{0}', space=vmem, size = 0x20000, scoped, tag = 'output window, operand 2']
    %13 = vsyncpa [#allocation3], 0
    %s14 = scalar_lea.sflag [#allocation3], 1
    %15 = vsyncpa %s14, 0
    %16 = vsyncpa [#allocation6], 0
    %17 = vsyncpa [#allocation4], 0
    %s18 = scalar_lea.sflag [#allocation4], 1
    %19 = vsyncpa %s18, 0
    %20 = vsyncpa [#allocation10], 0
    %s21 = scalar_lea.sflag [#allocation10], 1
    %22 = vsyncpa %s21, 0
    loop: start=0, step=1, limit=4
    $region2: #{tpu_custom_call.1} parent=1 // loop_pre_header
      _
    $region3: #{tpu_custom_call.1} parent=1 // loop_header
      %s24 = sphi 0, %s28
      %p25 = scmp.ge.s32.totalorder %s24, 4
      %s34 = sphi 0, %s36
      %s37 = sphi 0, %s34
      %s38 = sphi 0, %s37
      %s54 = sphi 0, %s38
      %s58 = sphi 0, %s58
      %s60 = sphi 0, %s58
      %s61 = sphi 0, %s60
      %s75 = sphi 0, %s61
      %s79 = sphi 0, %s79
      %s81 = sphi 0, %s79
      %s82 = sphi 0, %s81
      %s96 = sphi 0, %s82
      %s100 = sphi 0, %s100
      %s102 = sphi 0, %s100
      %s103 = sphi 0, %s102
      %s117 = sphi 0, %s103
      %s121 = sphi 0, %s121
      %s123 = sphi 0, %s121
      %s124 = sphi 0, %s123
      %s138 = sphi 0, %s124
      %s144 = sphi 0, %s146
      %s147 = sphi 0, %s144
      %s148 = sphi 0, %s147
      %s164 = sphi 0, %s148
      %s170 = sphi 0, %s172
      %s173 = sphi 0, %s170
      %s174 = sphi 0, %s173
      %s190 = sphi 0, %s174
      %s196 = sphi 0, %s198
      %s199 = sphi 0, %s196
      %s200 = sphi 0, %s199
      %s216 = sphi 0, %s200
    $region4: #{tpu_custom_call.1} parent=1 // loop_header_branch
      %27 = sbr.rel (%p25) target = $region8
    $region5: #{tpu_custom_call.1} parent=1 // loop_body
      %s29 = ssub.s32 %s24, 1
      %s30 = ssub.s32 %s24, 2
      %s31 = sadd.s32 %s24, 1
      %s32 = ssub.s32 %s24, %s31
      %p33 = scmp.eq.s32.totalorder %s32, 0
      %s35 = sadd.s32 %s34, 1
      %s36 = scalar_select %p33, %s34, %s35
      %p39 = pneg %p33
      %p40 = scmp.eq.s32.totalorder %s24, 1
      %p41 = por %p39, %p40
      %p42 = scmp.ne.s32.totalorder %s34, %s37
      %p43 = scmp.eq.s32.totalorder %s24, 0
      %p44 = por %p42, %p43
      %p45 = scmp.ne.s32.totalorder %s34, %s37
      %p46 = scmp.eq.s32.totalorder %s29, 1
      %p47 = por %p45, %p46
      %p48 = scmp.ne.s32.totalorder %s37, %s38
      %p49 = scmp.eq.s32.totalorder %s29, 0
      %p50 = por %p48, %p49
      %p51 = scmp.ne.s32.totalorder %s37, %s38
      %p52 = scmp.eq.s32.totalorder %s30, 1
      %p53 = por %p51, %p52
      %p55 = scmp.ne.s32.totalorder %s38, %s54
      %p56 = scmp.eq.s32.totalorder %s30, 0
      %p57 = por %p55, %p56
      %s59 = sadd.s32 %s58, 1
      %p62 = scmp.eq.s32.totalorder %s24, 1
      %p63 = scmp.ne.s32.totalorder %s58, %s60
      %p64 = scmp.eq.s32.totalorder %s24, 0
      %p65 = por %p63, %p64
      %p66 = scmp.ne.s32.totalorder %s58, %s60
      %p67 = scmp.eq.s32.totalorder %s29, 1
      %p68 = por %p66, %p67
      %p69 = scmp.ne.s32.totalorder %s60, %s61
      %p70 = scmp.eq.s32.totalorder %s29, 0
      %p71 = por %p69, %p70
      %p72 = scmp.ne.s32.totalorder %s60, %s61
      %p73 = scmp.eq.s32.totalorder %s30, 1
      %p74 = por %p72, %p73
      %p76 = scmp.ne.s32.totalorder %s61, %s75
      %p77 = scmp.eq.s32.totalorder %s30, 0
      %p78 = por %p76, %p77
      %s80 = sadd.s32 %s79, 1
      %p83 = scmp.eq.s32.totalorder %s24, 1
      %p84 = scmp.ne.s32.totalorder %s79, %s81
      %p85 = scmp.eq.s32.totalorder %s24, 0
      %p86 = por %p84, %p85
      %p87 = scmp.ne.s32.totalorder %s79, %s81
      %p88 = scmp.eq.s32.totalorder %s29, 1
      %p89 = por %p87, %p88
      %p90 = scmp.ne.s32.totalorder %s81, %s82
      %p91 = scmp.eq.s32.totalorder %s29, 0
      %p92 = por %p90, %p91
      %p93 = scmp.ne.s32.totalorder %s81, %s82
      %p94 = scmp.eq.s32.totalorder %s30, 1
      %p95 = por %p93, %p94
      %p97 = scmp.ne.s32.totalorder %s82, %s96
      %p98 = scmp.eq.s32.totalorder %s30, 0
      %p99 = por %p97, %p98
      %s101 = sadd.s32 %s100, 1
      %p104 = scmp.eq.s32.totalorder %s24, 1
      %p105 = scmp.ne.s32.totalorder %s100, %s102
      %p106 = scmp.eq.s32.totalorder %s24, 0
      %p107 = por %p105, %p106
      %p108 = scmp.ne.s32.totalorder %s100, %s102
      %p109 = scmp.eq.s32.totalorder %s29, 1
      %p110 = por %p108, %p109
      %p111 = scmp.ne.s32.totalorder %s102, %s103
      %p112 = scmp.eq.s32.totalorder %s29, 0
      %p113 = por %p111, %p112
      %p114 = scmp.ne.s32.totalorder %s102, %s103
      %p115 = scmp.eq.s32.totalorder %s30, 1
      %p116 = por %p114, %p115
      %p118 = scmp.ne.s32.totalorder %s103, %s117
      %p119 = scmp.eq.s32.totalorder %s30, 0
      %p120 = por %p118, %p119
      %s122 = sadd.s32 %s121, 1
      %p125 = scmp.eq.s32.totalorder %s24, 1
      %p126 = scmp.ne.s32.totalorder %s121, %s123
      %p127 = scmp.eq.s32.totalorder %s24, 0
      %p128 = por %p126, %p127
      %p129 = scmp.ne.s32.totalorder %s121, %s123
      %p130 = scmp.eq.s32.totalorder %s29, 1
      %p131 = por %p129, %p130
      %p132 = scmp.ne.s32.totalorder %s123, %s124
      %p133 = scmp.eq.s32.totalorder %s29, 0
      %p134 = por %p132, %p133
      %p135 = scmp.ne.s32.totalorder %s123, %s124
      %p136 = scmp.eq.s32.totalorder %s30, 1
      %p137 = por %p135, %p136
      %p139 = scmp.ne.s32.totalorder %s124, %s138
      %p140 = scmp.eq.s32.totalorder %s30, 0
      %p141 = por %p139, %p140
      %s142 = ssub.s32 %s24, %s31
      %p143 = scmp.eq.s32.totalorder %s142, 0
      %s145 = sadd.s32 %s144, 1
      %s146 = scalar_select %p143, %s144, %s145
      %p149 = pneg %p143
      %p150 = scmp.eq.s32.totalorder %s24, 1
      %p151 = por %p149, %p150
      %p152 = scmp.ne.s32.totalorder %s144, %s147
      %p153 = scmp.eq.s32.totalorder %s24, 0
      %p154 = por %p152, %p153
      %p155 = scmp.ne.s32.totalorder %s144, %s147
      %p156 = scmp.eq.s32.totalorder %s29, 1
      %p157 = por %p155, %p156
      %p158 = scmp.ne.s32.totalorder %s147, %s148
      %p159 = scmp.eq.s32.totalorder %s29, 0
      %p160 = por %p158, %p159
      %p161 = scmp.ne.s32.totalorder %s147, %s148
      %p162 = scmp.eq.s32.totalorder %s30, 1
      %p163 = por %p161, %p162
      %p165 = scmp.ne.s32.totalorder %s148, %s164
      %p166 = scmp.eq.s32.totalorder %s30, 0
      %p167 = por %p165, %p166
      %s168 = ssub.s32 %s24, %s31
      %p169 = scmp.eq.s32.totalorder %s168, 0
      %s171 = sadd.s32 %s170, 1
      %s172 = scalar_select %p169, %s170, %s171
      %p175 = pneg %p169
      %p176 = scmp.eq.s32.totalorder %s24, 1
      %p177 = por %p175, %p176
      %p178 = scmp.ne.s32.totalorder %s170, %s173
      %p179 = scmp.eq.s32.totalorder %s24, 0
      %p180 = por %p178, %p179
      %p181 = scmp.ne.s32.totalorder %s170, %s173
      %p182 = scmp.eq.s32.totalorder %s29, 1
      %p183 = por %p181, %p182
      %p184 = scmp.ne.s32.totalorder %s173, %s174
      %p185 = scmp.eq.s32.totalorder %s29, 0
      %p186 = por %p184, %p185
      %p187 = scmp.ne.s32.totalorder %s173, %s174
      %p188 = scmp.eq.s32.totalorder %s30, 1
      %p189 = por %p187, %p188
      %p191 = scmp.ne.s32.totalorder %s174, %s190
      %p192 = scmp.eq.s32.totalorder %s30, 0
      %p193 = por %p191, %p192
      %s194 = ssub.s32 %s24, %s31
      %p195 = scmp.eq.s32.totalorder %s194, 0
      %s197 = sadd.s32 %s196, 1
      %s198 = scalar_select %p195, %s196, %s197
      %p201 = pneg %p195
      %p202 = scmp.eq.s32.totalorder %s24, 1
      %p203 = por %p201, %p202
      %p204 = scmp.ne.s32.totalorder %s196, %s199
      %p205 = scmp.eq.s32.totalorder %s24, 0
      %p206 = por %p204, %p205
      %p207 = scmp.ne.s32.totalorder %s196, %s199
      %p208 = scmp.eq.s32.totalorder %s29, 1
      %p209 = por %p207, %p208
      %p210 = scmp.ne.s32.totalorder %s199, %s200
      %p211 = scmp.eq.s32.totalorder %s29, 0
      %p212 = por %p210, %p211
      %p213 = scmp.ne.s32.totalorder %s199, %s200
      %p214 = scmp.eq.s32.totalorder %s30, 1
      %p215 = por %p213, %p214
      %p217 = scmp.ne.s32.totalorder %s200, %s216
      %p218 = scmp.eq.s32.totalorder %s30, 0
      %p219 = por %p217, %p218
      %p220 = scmp.le.s32.totalorder 1, %s24
      %p221 = scmp.lt.s32.totalorder %s24, 3
      %p222 = pnand %p220, %p221
      %p223 = pneg %p222
      // Predicated region
      $region9: #{tpu_custom_call.1} parent=5 // pred_check
        _
      $region10: #{tpu_custom_call.1} parent=5 // pred_check_branch
        %225 = sbr.rel (%p222) target = $region12
      $region11: #{tpu_custom_call.1} parent=5 // pred_region
        %s226 = ssub.s32 %s24, 1
        // Predicated region
        $region13: #{tpu_custom_call.1} parent=11 // pred_check
          %p227 = pneg %p71
        $region14: #{tpu_custom_call.1} parent=11 // pred_check_branch
          %229 = sbr.rel (%p227) target = $region16
        $region15: #{tpu_custom_call.1} parent=11 // pred_region
          %s231 = ssub.s32 1024, 1024
          %232 = vsyncadd [#allocation6], %s231
          %s233 = sshll.u32 [#allocation5], 4
          %s234 = int_to_ptr.vmem [resolvable:$true] %s233
          %239 = dma.hbm_to_vmem [thread:$0]  %s1, 1024, %s234, [#allocation6], 64, 64, 4
        $region16: #{tpu_custom_call.1} parent=11 // pred_fallthru
          _
        // Predicated region
        $region17: #{tpu_custom_call.1} parent=11 // pred_check
          %p240 = pneg %p92
        $region18: #{tpu_custom_call.1} parent=11 // pred_check_branch
          %242 = sbr.rel (%p240) target = $region20
        $region19: #{tpu_custom_call.1} parent=11 // pred_region
          _
        $region20: #{tpu_custom_call.1} parent=11 // pred_fallthru
          _
        // Predicated region
        $region21: #{tpu_custom_call.1} parent=11 // pred_check
          %p243 = pneg %p113
        $region22: #{tpu_custom_call.1} parent=11 // pred_check_branch
          %245 = sbr.rel (%p243) target = $region24
        $region23: #{tpu_custom_call.1} parent=11 // pred_region
          %s247 = ssub.s32 1024, 1024
          %248 = vsyncadd [#allocation6], %s247
          %s249 = sshll.u32 [#allocation7], 4
          %s250 = int_to_ptr.vmem [resolvable:$true] %s249
          %255 = dma.hbm_to_vmem [thread:$0]  %s3, 1024, %s250, [#allocation6], 64, 64, 4
        $region24: #{tpu_custom_call.1} parent=11 // pred_fallthru
          _
        // Predicated region
        $region25: #{tpu_custom_call.1} parent=11 // pred_check
          %p256 = pneg %p134
        $region26: #{tpu_custom_call.1} parent=11 // pred_check_branch
          %258 = sbr.rel (%p256) target = $region28
        $region27: #{tpu_custom_call.1} parent=11 // pred_region
          _
        $region28: #{tpu_custom_call.1} parent=11 // pred_fallthru
          _
      $region12: #{tpu_custom_call.1} parent=5 // pred_fallthru
        _
      %p259 = scmp.lt.s32.totalorder %s24, 2
      // Predicated region
      $region29: #{tpu_custom_call.1} parent=5 // pred_check
        %p260 = pneg %p259
      $region30: #{tpu_custom_call.1} parent=5 // pred_check_branch
        %262 = sbr.rel (%p260) target = $region32
      $region31: #{tpu_custom_call.1} parent=5 // pred_region
        // Predicated region
        $region33: #{tpu_custom_call.1} parent=31 // pred_check
          %p263 = pneg %p44
        $region34: #{tpu_custom_call.1} parent=31 // pred_check_branch
          %265 = sbr.rel (%p263) target = $region36
        $region35: #{tpu_custom_call.1} parent=31 // pred_region
          %s266 = sand.u32 %s34, 1
          %s267 = scalar_lea.sflag [#allocation3], %s266
          %s268 = sand.u32 %s34, 1
          %s269 = smul.addr %s268, 64
          %s270 = scalar_lea.vmem [#allocation2], %s269
          %s271 = smul.u32 16, %s24
          %s273 = ssub.s32 1024, 1024
          %274 = vsyncadd %s267, %s273
          %s275 = smul.addr %s271, 64
          %s276 = scalar_lea.hbm %s0, %s275
          %s277 = sshll.u32 %s270, 4
          %s278 = int_to_ptr.vmem [resolvable:$true] %s277
          %283 = dma.hbm_to_vmem [thread:$0]  %s276, 1024, %s278, %s267, 64, 64, 4
        $region36: #{tpu_custom_call.1} parent=31 // pred_fallthru
          _
      $region32: #{tpu_custom_call.1} parent=5 // pred_fallthru
        _
      %p284 = scmp.le.s32.totalorder 1, %s24
      %p285 = scmp.lt.s32.totalorder %s24, 3
      %p286 = pnand %p284, %p285
      %p287 = pneg %p286
      // Predicated region
      $region37: #{tpu_custom_call.1} parent=5 // pred_check
        _
      $region38: #{tpu_custom_call.1} parent=5 // pred_check_branch
        %289 = sbr.rel (%p286) target = $region40
      $region39: #{tpu_custom_call.1} parent=5 // pred_region
        %s290 = ssub.s32 %s24, 1
        %s291 = sand.u32 %s37, 1
        %s292 = scalar_lea.sflag [#allocation3], %s291
        %s293 = sand.u32 %s37, 1
        %s294 = smul.addr %s293, 64
        %s295 = scalar_lea.vmem [#allocation2], %s294
        // Predicated region
        $region41: #{tpu_custom_call.1} parent=39 // pred_check
          %p296 = pneg %p50
        $region42: #{tpu_custom_call.1} parent=39 // pred_check_branch
          %298 = sbr.rel (%p296) target = $region44
        $region43: #{tpu_custom_call.1} parent=39 // pred_region
          %299 = dma.done %s292, 1024
        $region44: #{tpu_custom_call.1} parent=39 // pred_fallthru
          _
        // Predicated region
        $region45: #{tpu_custom_call.1} parent=39 // pred_check
          %p300 = pneg %p71
        $region46: #{tpu_custom_call.1} parent=39 // pred_check_branch
          %302 = sbr.rel (%p300) target = $region48
        $region47: #{tpu_custom_call.1} parent=39 // pred_region
          %303 = dma.done [#allocation6], 1024
        $region48: #{tpu_custom_call.1} parent=39 // pred_fallthru
          _
        // Predicated region
        $region49: #{tpu_custom_call.1} parent=39 // pred_check
          %p304 = pneg %p113
        $region50: #{tpu_custom_call.1} parent=39 // pred_check_branch
          %306 = sbr.rel (%p304) target = $region52
        $region51: #{tpu_custom_call.1} parent=39 // pred_region
          %307 = dma.done [#allocation6], 1024
        $region52: #{tpu_custom_call.1} parent=39 // pred_fallthru
          _
        %s308 = sand.u32 %s37, 1
        %s309 = scalar_lea.sflag [#allocation3], %s308
        %s310 = sand.u32 %s37, 1
        %s311 = smul.addr %s310, 64
        %s312 = scalar_lea.vmem [#allocation2], %s311
        %p313 = pneg %p50
        %p314 = pneg %p47
        %p315 = pneg %p71
        %p316 = pneg %p68
        %p317 = pneg %p92
        %p318 = pneg %p89
        %p319 = pneg %p113
        %p320 = pneg %p110
        %p321 = pneg %p134
        %p322 = pneg %p131
        %p323 = pneg %p160
        %p324 = pneg %p157
        %s325 = sand.u32 %s147, 1
        %s326 = scalar_lea.sflag [#allocation4], %s325
        %s327 = sand.u32 %s147, 1
        %s328 = smul.addr %s327, 128
        %s329 = scalar_lea.vmem [#allocation8], %s328
        %p330 = pneg %p186
        %p331 = pneg %p183
        %s332 = sand.u32 %s29, 1
        %s333 = scalar_lea.sflag [#allocation10], %s332
        %s334 = sand.u32 %s173, 1
        %s335 = smul.addr %s334, 128
        %s336 = scalar_lea.vmem [#allocation9], %s335
        %p337 = pneg %p212
        %p338 = pneg %p209
        %s339 = sand.u32 %s29, 1
        %s340 = scalar_lea.sflag [#allocation10], %s339
        %s341 = sand.u32 %s199, 1
        %s342 = smul.addr %s341, 128
        %s343 = scalar_lea.vmem [#allocation11], %s342
        %s344 = smul.u32 16, %s29
        %s345 = smul.u32 16, %s29
        %s346 = smul.u32 16, %s29
        %s347 = smul.u32 16, %s29
        %v349 = vld [vmem:[%s295] sm:$0xf]
        %v350 = vld [vmem:[%s295 + $0x4] sm:$0xf]
        %v351 = vld [vmem:[%s295 + $0x8] sm:$0xf]
        %v352 = vld [vmem:[%s295 + $0xc] sm:$0xf]
        %v353 = vld [vmem:[%s295 + $0x10] sm:$0xf]
        %v354 = vld [vmem:[%s295 + $0x14] sm:$0xf]
        %v355 = vld [vmem:[%s295 + $0x18] sm:$0xf]
        %v356 = vld [vmem:[%s295 + $0x1c] sm:$0xf]
        %v357 = vld [vmem:[%s295 + $0x20] sm:$0xf]
        %v358 = vld [vmem:[%s295 + $0x24] sm:$0xf]
        %v359 = vld [vmem:[%s295 + $0x28] sm:$0xf]
        %v360 = vld [vmem:[%s295 + $0x2c] sm:$0xf]
        %v361 = vld [vmem:[%s295 + $0x30] sm:$0xf]
        %v362 = vld [vmem:[%s295 + $0x34] sm:$0xf]
        %v363 = vld [vmem:[%s295 + $0x38] sm:$0xf]
        %v364 = vld [vmem:[%s295 + $0x3c] sm:$0xf]
        %v365 = vld [vmem:[#allocation5] sm:$0xf]
        %v366 = vld [vmem:[#allocation5 + $0x4] sm:$0xf]
        %v367 = vld [vmem:[#allocation5 + $0x8] sm:$0xf]
        %v368 = vld [vmem:[#allocation5 + $0xc] sm:$0xf]
        %v369 = vld [vmem:[#allocation5 + $0x10] sm:$0xf]
        %v370 = vld [vmem:[#allocation5 + $0x14] sm:$0xf]
        %v371 = vld [vmem:[#allocation5 + $0x18] sm:$0xf]
        %v372 = vld [vmem:[#allocation5 + $0x1c] sm:$0xf]
        %v373 = vld [vmem:[#allocation5 + $0x20] sm:$0xf]
        %v374 = vld [vmem:[#allocation5 + $0x24] sm:$0xf]
        %v375 = vld [vmem:[#allocation5 + $0x28] sm:$0xf]
        %v376 = vld [vmem:[#allocation5 + $0x2c] sm:$0xf]
        %v377 = vld [vmem:[#allocation5 + $0x30] sm:$0xf]
        %v378 = vld [vmem:[#allocation5 + $0x34] sm:$0xf]
        %v379 = vld [vmem:[#allocation5 + $0x38] sm:$0xf]
        %v380 = vld [vmem:[#allocation5 + $0x3c] sm:$0xf]
        %v381 = vld [vmem:[%s2] sm:$0x1]
        %v383 = vlaneseq
        %v384 = vshrl.u32 %v383, 7
        %v385 = vsub.s32 0, %v384
        %v386 = vrot.slane %v381, %v385
        %v404 = vunpack.c.l.b16 %v349
        %v405 = vunpack.c.l.b16 %v350
        %v406 = vunpack.c.l.b16 %v351
        %v407 = vunpack.c.l.b16 %v352
        %v408 = vunpack.c.l.b16 %v353
        %v409 = vunpack.c.l.b16 %v354
        %v410 = vunpack.c.l.b16 %v355
        %v411 = vunpack.c.l.b16 %v356
        %v412 = vunpack.c.l.b16 %v357
        %v413 = vunpack.c.l.b16 %v358
        %v414 = vunpack.c.l.b16 %v359
        %v415 = vunpack.c.l.b16 %v360
        %v416 = vunpack.c.l.b16 %v361
        %v417 = vunpack.c.l.b16 %v362
        %v418 = vunpack.c.l.b16 %v363
        %v419 = vunpack.c.l.b16 %v364
        %v420 = vpack.c.b16 %v405, %v404
        %v421 = vpack.c.b16 %v407, %v406
        %v422 = vpack.c.b16 %v409, %v408
        %v423 = vpack.c.b16 %v411, %v410
        %v424 = vpack.c.b16 %v413, %v412
        %v425 = vpack.c.b16 %v415, %v414
        %v426 = vpack.c.b16 %v417, %v416
        %v427 = vpack.c.b16 %v419, %v418
        %v452 = vunpack.c.l.b16 %v365
        %v453 = vunpack.c.l.b16 %v366
        %v454 = vunpack.c.l.b16 %v367
        %v455 = vunpack.c.l.b16 %v368
        %v456 = vunpack.c.l.b16 %v369
        %v457 = vunpack.c.l.b16 %v370
        %v458 = vunpack.c.l.b16 %v371
        %v459 = vunpack.c.l.b16 %v372
        %v460 = vunpack.c.l.b16 %v373
        %v461 = vunpack.c.l.b16 %v374
        %v462 = vunpack.c.l.b16 %v375
        %v463 = vunpack.c.l.b16 %v376
        %v464 = vunpack.c.l.b16 %v377
        %v465 = vunpack.c.l.b16 %v378
        %v466 = vunpack.c.l.b16 %v379
        %v467 = vunpack.c.l.b16 %v380
        %v468 = vpack.c.b16 %v453, %v452
        %v469 = vpack.c.b16 %v455, %v454
        %v470 = vpack.c.b16 %v457, %v456
        %v471 = vpack.c.b16 %v459, %v458
        %v472 = vpack.c.b16 %v461, %v460
        %v473 = vpack.c.b16 %v463, %v462
        %v474 = vpack.c.b16 %v465, %v464
        %v475 = vpack.c.b16 %v467, %v466
        %484 = vmatprep.subr.bf16.mxu0 0
        %485 = vmatpush1.bf16.msra.mxu0 %v468
        %486 = vmatprep.subr.bf16.mxu0 0
        %487 = vmatpush1.bf16.msra.mxu0 %v469
        %488 = vmatprep.subr.bf16.mxu0 0
        %489 = vmatpush1.bf16.msra.mxu0 %v470
        %490 = vmatprep.subr.bf16.mxu0 0
        %491 = vmatpush1.bf16.msra.mxu0 %v471
        %492 = vmatprep.subr.bf16.mxu0 0
        %493 = vmatpush1.bf16.msra.mxu0 %v472
        %494 = vmatprep.subr.bf16.mxu0 0
        %495 = vmatpush1.bf16.msra.mxu0 %v473
        %496 = vmatprep.subr.bf16.mxu0 0
        %497 = vmatpush1.bf16.msra.mxu0 %v474
        %498 = vmatprep.subr.bf16.mxu0 0
        %499 = vmatpush1.bf16.msra.mxu0 %v475
        %500 = vmatprep.subr.bf16.mxu0 0
        %501 = vmatpush1.bf16.msra.mxu0 0
        %502 = vmatprep.subr.bf16.mxu0 0
        %503 = vmatpush1.bf16.msra.mxu0 0
        %504 = vmatprep.subr.bf16.mxu0 0
        %505 = vmatpush1.bf16.msra.mxu0 0
        %506 = vmatprep.subr.bf16.mxu0 0
        %507 = vmatpush1.bf16.msra.mxu0 0
        %508 = vmatprep.subr.bf16.mxu0 0
        %509 = vmatpush1.bf16.msra.mxu0 0
        %510 = vmatprep.subr.bf16.mxu0 0
        %511 = vmatpush1.bf16.msra.mxu0 0
        %512 = vmatprep.subr.bf16.mxu0 0
        %513 = vmatpush1.bf16.msra.mxu0 0
        %514 = vmatprep.subr.bf16.mxu0 0
        %515 = vmatpush1.bf16.msra.mxu0 0
        %516 = vmatprep.mubr.bf16.mxu0 0
        %517 = vmatmul.mubr.bf16.gmra.mrb[0].mxu0 %v420
        %v518 = vpop.f32.mrb[0].mxu0
        %v519 = vadd.f32 %v386, %v518
        %v520 = vpop.f32.mrb[0].mxu0
        %v521 = vpop.f32.mrb[0].mxu0
        %v522 = vadd.f32 %v386, %v521
        %v523 = vpop.f32.mrb[0].mxu0
        %524 = vmatprep.mubr.bf16.mxu0 0
        %525 = vmatmul.mubr.bf16.gmra.mrb[0].mxu0 %v421
        %v526 = vpop.f32.mrb[0].mxu0
        %v527 = vadd.f32 %v386, %v526
        %v528 = vpop.f32.mrb[0].mxu0
        %v529 = vpop.f32.mrb[0].mxu0
        %v530 = vadd.f32 %v386, %v529
        %v531 = vpop.f32.mrb[0].mxu0
        %532 = vmatprep.mubr.bf16.mxu0 0
        %533 = vmatmul.mubr.bf16.gmra.mrb[0].mxu0 %v422
        %v534 = vpop.f32.mrb[0].mxu0
        %v535 = vadd.f32 %v386, %v534
        %v536 = vpop.f32.mrb[0].mxu0
        %v537 = vpop.f32.mrb[0].mxu0
        %v538 = vadd.f32 %v386, %v537
        %v539 = vpop.f32.mrb[0].mxu0
        %540 = vmatprep.mubr.bf16.mxu0 0
        %541 = vmatmul.mubr.bf16.gmra.mrb[0].mxu0 %v423
        %v542 = vpop.f32.mrb[0].mxu0
        %v543 = vadd.f32 %v386, %v542
        %v544 = vpop.f32.mrb[0].mxu0
        %v545 = vpop.f32.mrb[0].mxu0
        %v546 = vadd.f32 %v386, %v545
        %v547 = vpop.f32.mrb[0].mxu0
        %548 = vmatprep.mubr.bf16.mxu0 0
        %549 = vmatmul.mubr.bf16.gmra.mrb[0].mxu0 %v424
        %v550 = vpop.f32.mrb[0].mxu0
        %v551 = vadd.f32 %v386, %v550
        %v552 = vpop.f32.mrb[0].mxu0
        %v553 = vpop.f32.mrb[0].mxu0
        %v554 = vadd.f32 %v386, %v553
        %v555 = vpop.f32.mrb[0].mxu0
        %556 = vmatprep.mubr.bf16.mxu0 0
        %557 = vmatmul.mubr.bf16.gmra.mrb[0].mxu0 %v425
        %v558 = vpop.f32.mrb[0].mxu0
        %v559 = vadd.f32 %v386, %v558
        %v560 = vpop.f32.mrb[0].mxu0
        %v561 = vpop.f32.mrb[0].mxu0
        %v562 = vadd.f32 %v386, %v561
        %v563 = vpop.f32.mrb[0].mxu0
        %564 = vmatprep.mubr.bf16.mxu0 0
        %565 = vmatmul.mubr.bf16.gmra.mrb[0].mxu0 %v426
        %v566 = vpop.f32.mrb[0].mxu0
        %v567 = vadd.f32 %v386, %v566
        %v568 = vpop.f32.mrb[0].mxu0
        %v569 = vpop.f32.mrb[0].mxu0
        %v570 = vadd.f32 %v386, %v569
        %v571 = vpop.f32.mrb[0].mxu0
        %572 = vmatprep.mubr.bf16.mxu0 0
        %573 = vmatmul.mubr.bf16.gmra.mrb[0].mxu0 %v427
        %v574 = vpop.f32.mrb[0].mxu0
        %v575 = vadd.f32 %v386, %v574
        %v576 = vpop.f32.mrb[0].mxu0
        %v577 = vpop.f32.mrb[0].mxu0
        %v578 = vadd.f32 %v386, %v577
        %v579 = vpop.f32.mrb[0].mxu0
        %580 = vdwg.mxu0
        %v581 = vtanh.pop %v519
        %v582 = vtanh.pop %v522
        %v583 = vtanh.pop %v527
        %v584 = vtanh.pop %v530
        %v585 = vtanh.pop %v535
        %v586 = vtanh.pop %v538
        %v587 = vtanh.pop %v543
        %v588 = vtanh.pop %v546
        %v589 = vtanh.pop %v551
        %v590 = vtanh.pop %v554
        %v591 = vtanh.pop %v559
        %v592 = vtanh.pop %v562
        %v593 = vtanh.pop %v567
        %v594 = vtanh.pop %v570
        %v595 = vtanh.pop %v575
        %v596 = vtanh.pop %v578
        %v597 = vpack.c.bf16 %v582, %v581
        %v598 = vpack.c.bf16 %v584, %v583
        %v599 = vpack.c.bf16 %v586, %v585
        %v600 = vpack.c.bf16 %v588, %v587
        %v601 = vpack.c.bf16 %v590, %v589
        %v602 = vpack.c.bf16 %v592, %v591
        %v603 = vpack.c.bf16 %v594, %v593
        %v604 = vpack.c.bf16 %v596, %v595
        %v605 = vld [vmem:[#allocation7] sm:$0xf]
        %v606 = vld [vmem:[#allocation7 + $0x4] sm:$0xf]
        %v607 = vld [vmem:[#allocation7 + $0x8] sm:$0xf]
        %v608 = vld [vmem:[#allocation7 + $0xc] sm:$0xf]
        %v609 = vld [vmem:[#allocation7 + $0x10] sm:$0xf]
        %v610 = vld [vmem:[#allocation7 + $0x14] sm:$0xf]
        %v611 = vld [vmem:[#allocation7 + $0x18] sm:$0xf]
        %v612 = vld [vmem:[#allocation7 + $0x1c] sm:$0xf]
        %v613 = vld [vmem:[#allocation7 + $0x20] sm:$0xf]
        %v614 = vld [vmem:[#allocation7 + $0x24] sm:$0xf]
        %v615 = vld [vmem:[#allocation7 + $0x28] sm:$0xf]
        %v616 = vld [vmem:[#allocation7 + $0x2c] sm:$0xf]
        %v617 = vld [vmem:[#allocation7 + $0x30] sm:$0xf]
        %v618 = vld [vmem:[#allocation7 + $0x34] sm:$0xf]
        %v619 = vld [vmem:[#allocation7 + $0x38] sm:$0xf]
        %v620 = vld [vmem:[#allocation7 + $0x3c] sm:$0xf]
        %v621 = vld [vmem:[%s4] sm:$0x1]
        %v623 = vlaneseq
        %v624 = vshrl.u32 %v623, 7
        %v625 = vsub.s32 0, %v624
        %v626 = vrot.slane %v621, %v625
        %v644 = vunpack.c.l.b16 %v605
        %v645 = vunpack.c.l.b16 %v606
        %v646 = vunpack.c.l.b16 %v607
        %v647 = vunpack.c.l.b16 %v608
        %v648 = vunpack.c.l.b16 %v609
        %v649 = vunpack.c.l.b16 %v610
        %v650 = vunpack.c.l.b16 %v611
        %v651 = vunpack.c.l.b16 %v612
        %v652 = vunpack.c.l.b16 %v613
        %v653 = vunpack.c.l.b16 %v614
        %v654 = vunpack.c.l.b16 %v615
        %v655 = vunpack.c.l.b16 %v616
        %v656 = vunpack.c.l.b16 %v617
        %v657 = vunpack.c.l.b16 %v618
        %v658 = vunpack.c.l.b16 %v619
        %v659 = vunpack.c.l.b16 %v620
        %v660 = vpack.c.b16 %v645, %v644
        %v661 = vpack.c.b16 %v647, %v646
        %v662 = vpack.c.b16 %v649, %v648
        %v663 = vpack.c.b16 %v651, %v650
        %v664 = vpack.c.b16 %v653, %v652
        %v665 = vpack.c.b16 %v655, %v654
        %v666 = vpack.c.b16 %v657, %v656
        %v667 = vpack.c.b16 %v659, %v658
        %676 = vmatprep.subr.bf16.mxu0 0
        %677 = vmatpush1.bf16.msra.mxu0 %v660
        %678 = vmatprep.subr.bf16.mxu0 0
        %679 = vmatpush1.bf16.msra.mxu0 %v661
        %680 = vmatprep.subr.bf16.mxu0 0
        %681 = vmatpush1.bf16.msra.mxu0 %v662
        %682 = vmatprep.subr.bf16.mxu0 0
        %683 = vmatpush1.bf16.msra.mxu0 %v663
        %684 = vmatprep.subr.bf16.mxu0 0
        %685 = vmatpush1.bf16.msra.mxu0 %v664
        %686 = vmatprep.subr.bf16.mxu0 0
        %687 = vmatpush1.bf16.msra.mxu0 %v665
        %688 = vmatprep.subr.bf16.mxu0 0
        %689 = vmatpush1.bf16.msra.mxu0 %v666
        %690 = vmatprep.subr.bf16.mxu0 0
        %691 = vmatpush1.bf16.msra.mxu0 %v667
        %692 = vmatprep.subr.bf16.mxu0 0
        %693 = vmatpush1.bf16.msra.mxu0 0
        %694 = vmatprep.subr.bf16.mxu0 0
        %695 = vmatpush1.bf16.msra.mxu0 0
        %696 = vmatprep.subr.bf16.mxu0 0
        %697 = vmatpush1.bf16.msra.mxu0 0
        %698 = vmatprep.subr.bf16.mxu0 0
        %699 = vmatpush1.bf16.msra.mxu0 0
        %700 = vmatprep.subr.bf16.mxu0 0
        %701 = vmatpush1.bf16.msra.mxu0 0
        %702 = vmatprep.subr.bf16.mxu0 0
        %703 = vmatpush1.bf16.msra.mxu0 0
        %704 = vmatprep.subr.bf16.mxu0 0
        %705 = vmatpush1.bf16.msra.mxu0 0
        %706 = vmatprep.subr.bf16.mxu0 0
        %707 = vmatpush1.bf16.msra.mxu0 0
        %708 = vmatprep.mubr.bf16.mxu0 0
        %709 = vmatmul.mubr.bf16.gmra.mrb[0].mxu0 %v597
        %v710 = vpop.f32.mrb[0].mxu0
        %v711 = vadd.f32 %v626, %v710
        %v712 = vpop.f32.mrb[0].mxu0
        %v713 = vpop.f32.mrb[0].mxu0
        %v714 = vadd.f32 %v626, %v713
        %v715 = vpop.f32.mrb[0].mxu0
        %716 = vmatprep.mubr.bf16.mxu0 0
        %717 = vmatmul.mubr.bf16.gmra.mrb[0].mxu0 %v598
        %v718 = vpop.f32.mrb[0].mxu0
        %v719 = vadd.f32 %v626, %v718
        %v720 = vpop.f32.mrb[0].mxu0
        %v721 = vpop.f32.mrb[0].mxu0
        %v722 = vadd.f32 %v626, %v721
        %v723 = vpop.f32.mrb[0].mxu0
        %724 = vmatprep.mubr.bf16.mxu0 0
        %725 = vmatmul.mubr.bf16.gmra.mrb[0].mxu0 %v599
        %v726 = vpop.f32.mrb[0].mxu0
        %v727 = vadd.f32 %v626, %v726
        %v728 = vpop.f32.mrb[0].mxu0
        %v729 = vpop.f32.mrb[0].mxu0
        %v730 = vadd.f32 %v626, %v729
        %v731 = vpop.f32.mrb[0].mxu0
        %732 = vmatprep.mubr.bf16.mxu0 0
        %733 = vmatmul.mubr.bf16.gmra.mrb[0].mxu0 %v600
        %v734 = vpop.f32.mrb[0].mxu0
        %v735 = vadd.f32 %v626, %v734
        %v736 = vpop.f32.mrb[0].mxu0
        %v737 = vpop.f32.mrb[0].mxu0
        %v738 = vadd.f32 %v626, %v737
        %v739 = vpop.f32.mrb[0].mxu0
        %740 = vmatprep.mubr.bf16.mxu0 0
        %741 = vmatmul.mubr.bf16.gmra.mrb[0].mxu0 %v601
        %v742 = vpop.f32.mrb[0].mxu0
        %v743 = vadd.f32 %v626, %v742
        %v744 = vpop.f32.mrb[0].mxu0
        %v745 = vpop.f32.mrb[0].mxu0
        %v746 = vadd.f32 %v626, %v745
        %v747 = vpop.f32.mrb[0].mxu0
        %748 = vmatprep.mubr.bf16.mxu0 0
        %749 = vmatmul.mubr.bf16.gmra.mrb[0].mxu0 %v602
        %v750 = vpop.f32.mrb[0].mxu0
        %v751 = vadd.f32 %v626, %v750
        %v752 = vpop.f32.mrb[0].mxu0
        %v753 = vpop.f32.mrb[0].mxu0
        %v754 = vadd.f32 %v626, %v753
        %v755 = vpop.f32.mrb[0].mxu0
        %756 = vmatprep.mubr.bf16.mxu0 0
        %757 = vmatmul.mubr.bf16.gmra.mrb[0].mxu0 %v603
        %v758 = vpop.f32.mrb[0].mxu0
        %v759 = vadd.f32 %v626, %v758
        %v760 = vpop.f32.mrb[0].mxu0
        %v761 = vpop.f32.mrb[0].mxu0
        %v762 = vadd.f32 %v626, %v761
        %v763 = vpop.f32.mrb[0].mxu0
        %764 = vmatprep.mubr.bf16.mxu0 0
        %765 = vmatmul.mubr.bf16.gmra.mrb[0].mxu0 %v604
        %v766 = vpop.f32.mrb[0].mxu0
        %v767 = vadd.f32 %v626, %v766
        %v768 = vpop.f32.mrb[0].mxu0
        %v769 = vpop.f32.mrb[0].mxu0
        %v770 = vadd.f32 %v626, %v769
        %v771 = vpop.f32.mrb[0].mxu0
        %772 = vdwg.mxu0
        %773 = vmax.xlane.f32.xlu0 %v711
        %v774 = vpop.xlane.xlu0 %773
        %775 = vmax.xlane.f32.xlu0 %v714
        %v776 = vpop.xlane.xlu0 %775
        %777 = vmax.xlane.f32.xlu0 %v719
        %v778 = vpop.xlane.xlu0 %777
        %779 = vmax.xlane.f32.xlu0 %v722
        %v780 = vpop.xlane.xlu0 %779
        %781 = vmax.xlane.f32.xlu0 %v727
        %v782 = vpop.xlane.xlu0 %781
        %783 = vmax.xlane.f32.xlu0 %v730
        %v784 = vpop.xlane.xlu0 %783
        %785 = vmax.xlane.f32.xlu0 %v735
        %v786 = vpop.xlane.xlu0 %785
        %787 = vmax.xlane.f32.xlu0 %v738
        %v788 = vpop.xlane.xlu0 %787
        %789 = vmax.xlane.f32.xlu0 %v743
        %v790 = vpop.xlane.xlu0 %789
        %791 = vmax.xlane.f32.xlu0 %v746
        %v792 = vpop.xlane.xlu0 %791
        %793 = vmax.xlane.f32.xlu0 %v751
        %v794 = vpop.xlane.xlu0 %793
        %795 = vmax.xlane.f32.xlu0 %v754
        %v796 = vpop.xlane.xlu0 %795
        %797 = vmax.xlane.f32.xlu0 %v759
        %v798 = vpop.xlane.xlu0 %797
        %799 = vmax.xlane.f32.xlu0 %v762
        %v800 = vpop.xlane.xlu0 %799
        %801 = vmax.xlane.f32.xlu0 %v767
        %v802 = vpop.xlane.xlu0 %801
        %803 = vmax.xlane.f32.xlu0 %v770
        %v804 = vpop.xlane.xlu0 %803
        %v805 = vsub.f32 %v711, %v774
        %v806 = vsub.f32 %v714, %v776
        %v807 = vsub.f32 %v719, %v778
        %v808 = vsub.f32 %v722, %v780
        %v809 = vsub.f32 %v727, %v782
        %v810 = vsub.f32 %v730, %v784
        %v811 = vsub.f32 %v735, %v786
        %v812 = vsub.f32 %v738, %v788
        %v813 = vsub.f32 %v743, %v790
        %v814 = vsub.f32 %v746, %v792
        %v815 = vsub.f32 %v751, %v794
        %v816 = vsub.f32 %v754, %v796
        %v817 = vsub.f32 %v759, %v798
        %v818 = vsub.f32 %v762, %v800
        %v819 = vsub.f32 %v767, %v802
        %v820 = vsub.f32 %v770, %v804
        %v821 = vmul.f32 %v805, 1.442695
        %v822 = vpow.pop %v821
        %v823 = vmul.f32 %v806, 1.442695
        %v824 = vpow.pop %v823
        %v825 = vmul.f32 %v807, 1.442695
        %v826 = vpow.pop %v825
        %v827 = vmul.f32 %v808, 1.442695
        %v828 = vpow.pop %v827
        %v829 = vmul.f32 %v809, 1.442695
        %v830 = vpow.pop %v829
        %v831 = vmul.f32 %v810, 1.442695
        %v832 = vpow.pop %v831
        %v833 = vmul.f32 %v811, 1.442695
        %v834 = vpow.pop %v833
        %v835 = vmul.f32 %v812, 1.442695
        %v836 = vpow.pop %v835
        %v837 = vmul.f32 %v813, 1.442695
        %v838 = vpow.pop %v837
        %v839 = vmul.f32 %v814, 1.442695
        %v840 = vpow.pop %v839
        %v841 = vmul.f32 %v815, 1.442695
        %v842 = vpow.pop %v841
        %v843 = vmul.f32 %v816, 1.442695
        %v844 = vpow.pop %v843
        %v845 = vmul.f32 %v817, 1.442695
        %v846 = vpow.pop %v845
        %v847 = vmul.f32 %v818, 1.442695
        %v848 = vpow.pop %v847
        %v849 = vmul.f32 %v819, 1.442695
        %v850 = vpow.pop %v849
        %v851 = vmul.f32 %v820, 1.442695
        %v852 = vpow.pop %v851
        %853 = vadd.xlane.f32.xlu0 %v822
        %v854 = vpop.xlane.xlu0 %853
        %855 = vadd.xlane.f32.xlu0 %v824
        %v856 = vpop.xlane.xlu0 %855
        %857 = vadd.xlane.f32.xlu0 %v826
        %v858 = vpop.xlane.xlu0 %857
        %859 = vadd.xlane.f32.xlu0 %v828
        %v860 = vpop.xlane.xlu0 %859
        %861 = vadd.xlane.f32.xlu0 %v830
        %v862 = vpop.xlane.xlu0 %861
        %863 = vadd.xlane.f32.xlu0 %v832
        %v864 = vpop.xlane.xlu0 %863
        %865 = vadd.xlane.f32.xlu0 %v834
        %v866 = vpop.xlane.xlu0 %865
        %867 = vadd.xlane.f32.xlu0 %v836
        %v868 = vpop.xlane.xlu0 %867
        %869 = vadd.xlane.f32.xlu0 %v838
        %v870 = vpop.xlane.xlu0 %869
        %871 = vadd.xlane.f32.xlu0 %v840
        %v872 = vpop.xlane.xlu0 %871
        %873 = vadd.xlane.f32.xlu0 %v842
        %v874 = vpop.xlane.xlu0 %873
        %875 = vadd.xlane.f32.xlu0 %v844
        %v876 = vpop.xlane.xlu0 %875
        %877 = vadd.xlane.f32.xlu0 %v846
        %v878 = vpop.xlane.xlu0 %877
        %879 = vadd.xlane.f32.xlu0 %v848
        %v880 = vpop.xlane.xlu0 %879
        %881 = vadd.xlane.f32.xlu0 %v850
        %v882 = vpop.xlane.xlu0 %881
        %883 = vadd.xlane.f32.xlu0 %v852
        %v884 = vpop.xlane.xlu0 %883
        %v885 = vrcp.pop %v854
        %v886 = vrcp.pop %v856
        %v887 = vrcp.pop %v858
        %v888 = vrcp.pop %v860
        %v889 = vrcp.pop %v862
        %v890 = vrcp.pop %v864
        %v891 = vrcp.pop %v866
        %v892 = vrcp.pop %v868
        %v893 = vrcp.pop %v870
        %v894 = vrcp.pop %v872
        %v895 = vrcp.pop %v874
        %v896 = vrcp.pop %v876
        %v897 = vrcp.pop %v878
        %v898 = vrcp.pop %v880
        %v899 = vrcp.pop %v882
        %v900 = vrcp.pop %v884
        %v901 = vmul.f32 %v822, %v885
        %v902 = vmul.f32 %v824, %v886
        %v903 = vmul.f32 %v826, %v887
        %v904 = vmul.f32 %v828, %v888
        %v905 = vmul.f32 %v830, %v889
        %v906 = vmul.f32 %v832, %v890
        %v907 = vmul.f32 %v834, %v891
        %v908 = vmul.f32 %v836, %v892
        %v909 = vmul.f32 %v838, %v893
        %v910 = vmul.f32 %v840, %v894
        %v911 = vmul.f32 %v842, %v895
        %v912 = vmul.f32 %v844, %v896
        %v913 = vmul.f32 %v846, %v897
        %v914 = vmul.f32 %v848, %v898
        %v915 = vmul.f32 %v850, %v899
        %v916 = vmul.f32 %v852, %v900
        %917 = vst [vmem:[%s329] sm:$0xff] %v581
        %918 = vst [vmem:[%s329 + $0x8] sm:$0xff] %v582
        %919 = vst [vmem:[%s329 + $0x10] sm:$0xff] %v583
        %920 = vst [vmem:[%s329 + $0x18] sm:$0xff] %v584
        %921 = vst [vmem:[%s329 + $0x20] sm:$0xff] %v585
        %922 = vst [vmem:[%s329 + $0x28] sm:$0xff] %v586
        %923 = vst [vmem:[%s329 + $0x30] sm:$0xff] %v587
        %924 = vst [vmem:[%s329 + $0x38] sm:$0xff] %v588
        %925 = vst [vmem:[%s329 + $0x40] sm:$0xff] %v589
        %926 = vst [vmem:[%s329 + $0x48] sm:$0xff] %v590
        %927 = vst [vmem:[%s329 + $0x50] sm:$0xff] %v591
        %928 = vst [vmem:[%s329 + $0x58] sm:$0xff] %v592
        %929 = vst [vmem:[%s329 + $0x60] sm:$0xff] %v593
        %930 = vst [vmem:[%s329 + $0x68] sm:$0xff] %v594
        %931 = vst [vmem:[%s329 + $0x70] sm:$0xff] %v595
        %932 = vst [vmem:[%s329 + $0x78] sm:$0xff] %v596
        %933 = vst [vmem:[%s336] sm:$0xff] %v711
        %934 = vst [vmem:[%s336 + $0x8] sm:$0xff] %v714
        %935 = vst [vmem:[%s336 + $0x10] sm:$0xff] %v719
        %936 = vst [vmem:[%s336 + $0x18] sm:$0xff] %v722
        %937 = vst [vmem:[%s336 + $0x20] sm:$0xff] %v727
        %938 = vst [vmem:[%s336 + $0x28] sm:$0xff] %v730
        %939 = vst [vmem:[%s336 + $0x30] sm:$0xff] %v735
        %940 = vst [vmem:[%s336 + $0x38] sm:$0xff] %v738
        %941 = vst [vmem:[%s336 + $0x40] sm:$0xff] %v743
        %942 = vst [vmem:[%s336 + $0x48] sm:$0xff] %v746
        %943 = vst [vmem:[%s336 + $0x50] sm:$0xff] %v751
        %944 = vst [vmem:[%s336 + $0x58] sm:$0xff] %v754
        %945 = vst [vmem:[%s336 + $0x60] sm:$0xff] %v759
        %946 = vst [vmem:[%s336 + $0x68] sm:$0xff] %v762
        %947 = vst [vmem:[%s336 + $0x70] sm:$0xff] %v767
        %948 = vst [vmem:[%s336 + $0x78] sm:$0xff] %v770
        %949 = vst [vmem:[%s343] sm:$0xff] %v901
        %950 = vst [vmem:[%s343 + $0x8] sm:$0xff] %v902
        %951 = vst [vmem:[%s343 + $0x10] sm:$0xff] %v903
        %952 = vst [vmem:[%s343 + $0x18] sm:$0xff] %v904
        %953 = vst [vmem:[%s343 + $0x20] sm:$0xff] %v905
        %954 = vst [vmem:[%s343 + $0x28] sm:$0xff] %v906
        %955 = vst [vmem:[%s343 + $0x30] sm:$0xff] %v907
        %956 = vst [vmem:[%s343 + $0x38] sm:$0xff] %v908
        %957 = vst [vmem:[%s343 + $0x40] sm:$0xff] %v909
        %958 = vst [vmem:[%s343 + $0x48] sm:$0xff] %v910
        %959 = vst [vmem:[%s343 + $0x50] sm:$0xff] %v911
        %960 = vst [vmem:[%s343 + $0x58] sm:$0xff] %v912
        %961 = vst [vmem:[%s343 + $0x60] sm:$0xff] %v913
        %962 = vst [vmem:[%s343 + $0x68] sm:$0xff] %v914
        %963 = vst [vmem:[%s343 + $0x70] sm:$0xff] %v915
        %964 = vst [vmem:[%s343 + $0x78] sm:$0xff] %v916
        %s965 = sand.u32 %s147, 1
        %s966 = scalar_lea.sflag [#allocation4], %s965
        %s967 = sand.u32 %s147, 1
        %s968 = smul.addr %s967, 128
        %s969 = scalar_lea.vmem [#allocation8], %s968
        %s970 = sand.u32 %s29, 1
        %s971 = scalar_lea.sflag [#allocation10], %s970
        %s972 = sand.u32 %s173, 1
        %s973 = smul.addr %s972, 128
        %s974 = scalar_lea.vmem [#allocation9], %s973
        %s975 = sand.u32 %s29, 1
        %s976 = scalar_lea.sflag [#allocation10], %s975
        %s977 = sand.u32 %s199, 1
        %s978 = smul.addr %s977, 128
        %s979 = scalar_lea.vmem [#allocation11], %s978
        // Predicated region
        $region53: #{tpu_custom_call.1} parent=39 // pred_check
          %p980 = pneg %p157
        $region54: #{tpu_custom_call.1} parent=39 // pred_check_branch
          %982 = sbr.rel (%p980) target = $region56
        $region55: #{tpu_custom_call.1} parent=39 // pred_region
          %s983 = smul.u32 16, %s29
          %s985 = ssub.s32 2048, 2048
          %986 = vsyncadd %s966, %s985
          %s987 = smul.addr %s983, 128
          %s988 = scalar_lea.hbm %s5, %s987
          %s989 = sshll.u32 %s969, 4
          %s990 = int_to_ptr.vmem [resolvable:$true] %s989
          %995 = dma.vmem_to_hbm [thread:$0]  %s990, 2048, %s988, %s966, 128, 128, 8
        $region56: #{tpu_custom_call.1} parent=39 // pred_fallthru
          _
        // Predicated region
        $region57: #{tpu_custom_call.1} parent=39 // pred_check
          %p996 = pneg %p183
        $region58: #{tpu_custom_call.1} parent=39 // pred_check_branch
          %998 = sbr.rel (%p996) target = $region60
        $region59: #{tpu_custom_call.1} parent=39 // pred_region
          %s999 = smul.u32 16, %s29
          %s1001 = ssub.s32 2048, 2048
          %1002 = vsyncadd %s971, %s1001
          %s1003 = smul.addr %s999, 128
          %s1004 = scalar_lea.hbm %s6, %s1003
          %s1005 = sshll.u32 %s974, 4
          %s1006 = int_to_ptr.vmem [resolvable:$true] %s1005
          %1011 = dma.vmem_to_hbm [thread:$0]  %s1006, 2048, %s1004, %s971, 128, 128, 8
        $region60: #{tpu_custom_call.1} parent=39 // pred_fallthru
          _
        // Predicated region
        $region61: #{tpu_custom_call.1} parent=39 // pred_check
          %p1012 = pneg %p209
        $region62: #{tpu_custom_call.1} parent=39 // pred_check_branch
          %1014 = sbr.rel (%p1012) target = $region64
        $region63: #{tpu_custom_call.1} parent=39 // pred_region
          %s1015 = smul.u32 16, %s29
          %s1017 = ssub.s32 2048, 2048
          %1018 = vsyncadd %s976, %s1017
          %s1019 = smul.addr %s1015, 128
          %s1020 = scalar_lea.hbm %s7, %s1019
          %s1021 = sshll.u32 %s979, 4
          %s1022 = int_to_ptr.vmem [resolvable:$true] %s1021
          %1027 = dma.vmem_to_hbm [thread:$0]  %s1022, 2048, %s1020, %s976, 128, 128, 8
        $region64: #{tpu_custom_call.1} parent=39 // pred_fallthru
          _
      $region40: #{tpu_custom_call.1} parent=5 // pred_fallthru
        _
      %p1028 = scmp.le.s32.totalorder 2, %s24
      // Predicated region
      $region65: #{tpu_custom_call.1} parent=5 // pred_check
        %p1029 = pneg %p1028
      $region66: #{tpu_custom_call.1} parent=5 // pred_check_branch
        %1031 = sbr.rel (%p1029) target = $region68
      $region67: #{tpu_custom_call.1} parent=5 // pred_region
        %s1032 = ssub.s32 %s24, 2
        // Predicated region
        $region69: #{tpu_custom_call.1} parent=67 // pred_check
          %p1033 = pneg %p163
        $region70: #{tpu_custom_call.1} parent=67 // pred_check_branch
          %1035 = sbr.rel (%p1033) target = $region72
        $region71: #{tpu_custom_call.1} parent=67 // pred_region
          %s1036 = sand.u32 %s148, 1
          %s1037 = scalar_lea.sflag [#allocation4], %s1036
          %s1038 = sand.u32 %s148, 1
          %s1039 = smul.addr %s1038, 128
          %s1040 = scalar_lea.vmem [#allocation8], %s1039
          %1041 = dma.done %s1037, 2048
        $region72: #{tpu_custom_call.1} parent=67 // pred_fallthru
          _
        // Predicated region
        $region73: #{tpu_custom_call.1} parent=67 // pred_check
          %p1042 = pneg %p189
        $region74: #{tpu_custom_call.1} parent=67 // pred_check_branch
          %1044 = sbr.rel (%p1042) target = $region76
        $region75: #{tpu_custom_call.1} parent=67 // pred_region
          %s1045 = sand.u32 %s30, 1
          %s1046 = scalar_lea.sflag [#allocation10], %s1045
          %s1047 = sand.u32 %s174, 1
          %s1048 = smul.addr %s1047, 128
          %s1049 = scalar_lea.vmem [#allocation9], %s1048
          %1050 = dma.done %s1046, 2048
        $region76: #{tpu_custom_call.1} parent=67 // pred_fallthru
          _
        // Predicated region
        $region77: #{tpu_custom_call.1} parent=67 // pred_check
          %p1051 = pneg %p215
        $region78: #{tpu_custom_call.1} parent=67 // pred_check_branch
          %1053 = sbr.rel (%p1051) target = $region80
        $region79: #{tpu_custom_call.1} parent=67 // pred_region
          %s1054 = sand.u32 %s30, 1
          %s1055 = scalar_lea.sflag [#allocation10], %s1054
          %s1056 = sand.u32 %s200, 1
          %s1057 = smul.addr %s1056, 128
          %s1058 = scalar_lea.vmem [#allocation11], %s1057
          %1059 = dma.done %s1055, 2048
        $region80: #{tpu_custom_call.1} parent=67 // pred_fallthru
          _
      $region68: #{tpu_custom_call.1} parent=5 // pred_fallthru
        _
    $region6: #{tpu_custom_call.1} parent=1 // loop_footer
      %s28 = sadd.s32 1, %s24
    $region7: #{tpu_custom_call.1} parent=1 // loop_footer_branch
      %23 = sbr.rel target = $region3
    $region8: #{tpu_custom_call.1} parent=1 // loop_exit
      _
    %1060 = vsyncpa [#allocation3], 1
    %s1061 = scalar_lea.sflag [#allocation3], 1
    %1062 = vsyncpa %s1061, 1
    %1063 = vsyncpa [#allocation6], 1
    %1064 = vsyncpa [#allocation4], 1
    %s1065 = scalar_lea.sflag [#allocation4], 1
    %1066 = vsyncpa %s1065, 1
    %1067 = vsyncpa [#allocation10], 1
    %s1068 = scalar_lea.sflag [#allocation10], 1
    %1069 = vsyncpa %s1068, 1

</llo_original>
